<compile_context>
chip_gen: v7x
topology: tpu7x:2x2x1
jax: 0.10.0
libtpu: 0.0.40
codegen_flags: <defaults>
</compile_context>

<pallas_src>
import functools

import jax
import jax.numpy as jnp
from jax.experimental import pallas as pl
from jax.experimental.pallas import tpu as pltpu


def _round_up(x, m):
    return ((x + m - 1) // m) * m


def _signed_pow(x, p):
    # matches torch `x.pow(p)` semantics (no abs); integer p uses repeated
    # multiplies so big tiles never hit a per-element transcendental pow.
    if p == 2:
        return x * x
    if isinstance(p, int) and p >= 1:
        r = x
        for _ in range(p - 1):
            r = r * x
        return r
    return x ** p


def _detect_num_cores():
    """Return 2 only for multi-TensorCore chips; default 1 (v5e/v6e)."""
    try:
        info = pltpu.get_tpu_info()
        for name in ("num_cores", "core_count", "num_tensorcores"):
            v = getattr(info, name, None)
            if v is not None:
                v = int(v)
                if v >= 1:
                    return min(v, 2)
    except Exception:
        pass
    try:
        v = getattr(jax.devices()[0], "num_cores", None)
        if v is not None:
            v = int(v)
            if v >= 1:
                return min(v, 2)
    except Exception:
        pass
    return 1


def _scaled_lp_sums_kernel(bmin_ref, bmax_ref, bidx_ref, in_ref, tgt_ref,
                           acc_ref, *, num_batches, p, w):
    # zero this core's resident accumulator at the start of its row walk
    @pl.when(pl.program_id(1) == 0)
    def _init():
        acc_ref[...] = jnp.zeros_like(acc_ref)

    tile = pl.program_id(0) * pl.num_programs(1) + pl.program_id(1)
    bmin = bmin_ref[tile]
    bmax = bmax_ref[tile]

    x = in_ref[...].astype(jnp.float32)        # (TN, W) lane-dense
    t = tgt_ref[...].astype(jnp.float32)       # (TN, W)
    diff_p = _signed_pow(x - t, p)
    tgt_p = _signed_pow(t, p)
    bidx = bidx_ref[...].astype(jnp.int32)     # (TN, W); -1 marks padding

    # segmented sum on the VPU/XLU; buckets absent from this tile are skipped.
    for b in range(num_batches):
        @pl.when((b >= bmin) & (b <= bmax))
        def _acc(b=b):
            m = bidx == b
            d = jnp.sum(jnp.where(m, diff_p, 0.0), axis=0, keepdims=True)
            s = jnp.sum(jnp.where(m, tgt_p, 0.0), axis=0, keepdims=True)
            acc_ref[pl.ds(b, 1), pl.ds(0, w)] += d
            acc_ref[pl.ds(b, 1), pl.ds(w, w)] += s


def _partial_sums_pallas(inp_m, tgt_m, bidx_main, num_batches, p, g, c,
                         target_step_bytes, num_cores):
    """Per-(batch, channel) sums of (in-tgt)^p and tgt^p over the packed rows."""
    n_pack, w = inp_m.shape                      # w = g * c
    itemsize = inp_m.dtype.itemsize
    idx_dtype = jnp.int8 if num_batches <= 127 else jnp.int32
    idx_size = 1 if num_batches <= 127 else 4
    b_pad = _round_up(max(num_batches, 8), 8)

    # lane-expanded bucket ids (tiny relative to the data, int8 when possible)
    bidx_lane = jnp.repeat(bidx_main.reshape(n_pack, g), c, axis=1).astype(idx_dtype)

    # row tile: ~target_step_bytes of real data per grid step; multiple of 32
    # sublanes (covers f32 / bf16 / int8 minimum tiles).
    sub = 32
    row_bytes = 2 * w * itemsize + w * idx_size
    tn = max(sub, (int(target_step_bytes) // row_bytes // sub) * sub)
    tn = min(tn, _round_up(pl.cdiv(n_pack, num_cores), sub))

    # tiny inputs only: pad rows so a block never exceeds the array extent
    if n_pack < tn:
        rp = tn - n_pack
        inp_m = jnp.pad(inp_m, ((0, rp), (0, 0)))
        tgt_m = jnp.pad(tgt_m, ((0, rp), (0, 0)))
        n_pack_k = tn
    else:
        n_pack_k = n_pack

    n_tiles = pl.cdiv(n_pack_k, tn)
    tiles_per_core = pl.cdiv(n_tiles, num_cores)
    n_tiles_grid = num_cores * tiles_per_core

    # pad only batch_idx (tiny) with -1: padded / out-of-range rows match no bucket
    cover = n_tiles * tn
    if bidx_lane.shape[0] < cover:
        bidx_lane = jnp.pad(bidx_lane, ((0, cover - bidx_lane.shape[0]), (0, 0)),
                            constant_values=-1)

    # per-tile bucket ranges (scalar prefetch) so absent buckets are skipped
    rows_per_tile = tn * g
    bt = jnp.pad(bidx_main, (0, n_tiles * rows_per_tile - bidx_main.shape[0]),
                 constant_values=-1).reshape(n_tiles, rows_per_tile)
    valid = bt >= 0
    bmin = jnp.min(jnp.where(valid, bt, num_batches), axis=1).astype(jnp.int32)
    bmax = jnp.max(jnp.where(valid, bt, -1), axis=1).astype(jnp.int32)
    if n_tiles_grid > n_tiles:
        extra = n_tiles_grid - n_tiles
        bmin = jnp.concatenate([bmin, jnp.full((extra,), num_batches, jnp.int32)])
        bmax = jnp.concatenate([bmax, jnp.full((extra,), -1, jnp.int32)])

    def data_map(ci, ti, bmin_ref, bmax_ref):
        t = ci * tiles_per_core + ti
        # phantom tiles (last core, uneven split) clamp to the last real tile;
        # their bucket range is empty so they accumulate nothing.
        return (jnp.minimum(t, n_tiles - 1), 0)

    def acc_map(ci, ti, bmin_ref, bmax_ref):
        return (ci, 0, 0)

    kernel = functools.partial(_scaled_lp_sums_kernel,
                               num_batches=num_batches, p=p, w=w)

    buf_bytes = 2 * tn * (2 * w * itemsize + w * idx_size)   # double-buffered inputs
    vmem_limit = int(min(64 * 1024 * 1024, max(32 * 1024 * 1024, 4 * buf_bytes)))
    pow_muls = (p - 1) if (isinstance(p, int) and p >= 1) else 2
    flops = n_pack_k * w * (1 + 2 * pow_muls + 6)
    transc = 0 if isinstance(p, int) else 2 * n_pack_k * w
    bytes_accessed = n_pack_k * w * (2 * itemsize + idx_size) \
        + num_cores * b_pad * 2 * w * 4

    accs = pl.pallas_call(
        kernel,
        grid_spec=pltpu.PrefetchScalarGridSpec(
            num_scalar_prefetch=2,
            grid=(num_cores, tiles_per_core),
            in_specs=[
                pl.BlockSpec((tn, w), data_map),   # lane-expanded batch ids
                pl.BlockSpec((tn, w), data_map),   # packed input
                pl.BlockSpec((tn, w), data_map),   # packed target
            ],
            out_specs=pl.BlockSpec((None, b_pad, 2 * w), acc_map),
        ),
        out_shape=jax.ShapeDtypeStruct((num_cores, b_pad, 2 * w), jnp.float32),
        compiler_params=pltpu.CompilerParams(
            dimension_semantics=("parallel", "arbitrary"),
            vmem_limit_bytes=vmem_limit,
        ),
        cost_estimate=pl.CostEstimate(flops=int(flops), transcendentals=int(transc),
                                      bytes_accessed=int(bytes_accessed)),
    )(bmin, bmax, bidx_lane, inp_m, tgt_m)

    acc = jnp.sum(accs, axis=0)[:num_batches]          # (B, 2W)
    d_acc = acc[:, :w].reshape(num_batches, g, c).sum(axis=1)
    t_acc = acc[:, w:].reshape(num_batches, g, c).sum(axis=1)
    return d_acc, t_acc


def scaled_lp_loss(inp, target, batch_idx, num_batches, p=2, clamp_denom=0.0,
                   reduction="mean", target_step_bytes=2 * 1024 * 1024,
                   num_cores=None):
    """Pallas TPU implementation of ScaledLpLoss(p, clamp_denom, reduction)."""
    n, c = inp.shape
    batch_idx = batch_idx.astype(jnp.int32).reshape(n)
    if num_cores is None:
        num_cores = _detect_num_cores()

    # lane-dense packing: fold G = 128 // C consecutive rows into the lane dim
    g = 128 // c if (c <= 128 and 128 % c == 0) else 1
    w = g * c
    n_main = (n // g) * g
    n_tail = n - n_main
    n_pack = n_main // g

    if n_pack > 0:
        # contiguous reshape (free when n % g == 0; otherwise XLA slices the
        # leading rows once and the < G-row tail is folded in below).
        inp_m = inp[:n_main].reshape(n_pack, w)
        tgt_m = target[:n_main].reshape(n_pack, w)
        d_acc, t_acc = _partial_sums_pallas(inp_m, tgt_m, batch_idx[:n_main],
                                            num_batches, p, g, c,
                                            target_step_bytes, num_cores)
    else:
        d_acc = jnp.zeros((num_batches, c), jnp.float32)
        t_acc = jnp.zeros((num_batches, c), jnp.float32)

    if n_tail > 0:
        # ragged tail (< 128 rows): tiny plain-JAX contribution
        xt = inp[n_main:].astype(jnp.float32)
        tt = target[n_main:].astype(jnp.float32)
        onehot = (batch_idx[n_main:, None]
                  == jnp.arange(num_batches, dtype=jnp.int32)[None, :]
                  ).astype(jnp.float32)                       # (n_tail, B)
        d_acc = d_acc + onehot.T @ _signed_pow(xt - tt, p)
        t_acc = t_acc + onehot.T @ _signed_pow(tt, p)

    # tiny O(B*C) epilogue: p-root / clamp / ratio / reduction
    if p == 2:
        diff_norms = jnp.sqrt(d_acc)
        tgt_norms = jnp.sqrt(t_acc)
    else:
        diff_norms = d_acc ** (1.0 / p)
        tgt_norms = t_acc ** (1.0 / p)
    tgt_norms = jnp.maximum(tgt_norms, jnp.float32(clamp_denom))
    val = diff_norms / tgt_norms
    if reduction == "mean":
        return jnp.mean(val)
    if reduction == "sum":
        return jnp.sum(val)
    if reduction == "none":
        return val
    raise NotImplementedError(reduction)


def _reference(inp, target, batch_idx, num_batches, p=2, clamp_denom=0.0,
               reduction="mean"):
    # mirrors the torch module: x.square()/x.pow(p) (no abs), scatter-sum,
    # p-root, clamp_min, ratio, reduction
    def powp(x):
        return jnp.square(x) if p == 2 else x ** p
    dsum = jax.ops.segment_sum(powp(inp - target), batch_idx,
                               num_segments=num_batches)
    tsum = jax.ops.segment_sum(powp(target), batch_idx,
                               num_segments=num_batches)
    if p == 2:
        dn, tnrm = jnp.sqrt(dsum), jnp.sqrt(tsum)
    else:
        dn, tnrm = dsum ** (1.0 / p), tsum ** (1.0 / p)
    val = dn / jnp.maximum(tnrm, clamp_denom)
    if reduction == "mean":
        return jnp.mean(val)
    if reduction == "sum":
        return jnp.sum(val)
    return val


if __name__ == "__main__":
    key = jax.random.PRNGKey(0)
    k1, k2, k3, k4 = jax.random.split(key, 4)

    # config 1: ragged N (exercises G=8 lane packing, partial tiles, tail rows)
    B, C = 3, 16
    sizes = (70, 65, 68)
    N = sum(sizes)
    batch_idx = jnp.concatenate(
        [jnp.full((s,), i, jnp.int32) for i, s in enumerate(sizes)])
    x = jax.random.normal(k1, (N, C), dtype=jnp.float32)
    y = jax.random.normal(k2, (N, C), dtype=jnp.float32)

    out = scaled_lp_loss(x, y, batch_idx, num_batches=B, p=2, clamp_denom=0.0,
                         reduction="mean")
    out = jax.block_until_ready(out)
    ref = _reference(x, y, batch_idx, B, p=2, clamp_denom=0.0, reduction="mean")
    assert jnp.allclose(out, ref, rtol=1e-5, atol=1e-5), (out, ref)

    # config 2: interleaved buckets, even p != 2, clamped denom, sum reduction
    B2, C2, N2 = 2, 8, 96
    bidx2 = (jnp.arange(N2, dtype=jnp.int32) % B2)
    x2 = jax.random.normal(k3, (N2, C2), dtype=jnp.float32)
    y2 = jax.random.normal(k4, (N2, C2), dtype=jnp.float32)

    out2 = scaled_lp_loss(x2, y2, bidx2, num_batches=B2, p=4, clamp_denom=1.0,
                          reduction="sum")
    out2 = jax.block_until_ready(out2)
    ref2 = _reference(x2, y2, bidx2, B2, p=4, clamp_denom=1.0, reduction="sum")
    assert jnp.allclose(out2, ref2, rtol=1e-4, atol=1e-4), (out2, ref2)

    print("KERNEL_OK")
</pallas_src>

<mosaic_0001>
module attributes {stable_mosaic.version = 11 : i64} {
  func.func @_scaled_lp_sums_kernel(%arg0: i32, %arg1: i32, %arg2: memref<1xi32, #tpu.memory_space<smem>>, %arg3: memref<1xi32, #tpu.memory_space<smem>>, %arg4: memref<32x128xi8, #tpu.memory_space<vmem>>, %arg5: memref<32x128xf32, #tpu.memory_space<vmem>>, %arg6: memref<32x128xf32, #tpu.memory_space<vmem>>, %arg7: memref<1x8x256xf32, #tpu.memory_space<vmem>>) attributes {dimension_semantics = [#tpu.dimension_semantics<parallel>, #tpu.dimension_semantics<arbitrary>], iteration_bounds = array<i64: 1, 1>, scalar_prefetch = 2 : i64, scratch_operands = 0 : i64, tpu.core_type = #tpu.core_type<tc>, window_params = [{transform_indices = @transform_0, window_bounds = array<i64: 32, 128>}, {transform_indices = @transform_1, window_bounds = array<i64: 32, 128>}, {transform_indices = @transform_2, window_bounds = array<i64: 32, 128>}, {transform_indices = @transform_3, window_bounds = array<i64: 1, 8, 256>}]} {
    %c0_i32 = arith.constant 0 : i32
    %0 = arith.cmpi eq, %arg1, %c0_i32 : i32
    %1 = arith.extui %0 : i1 to i32
    %c0_i32_0 = arith.constant 0 : i32
    %2 = arith.cmpi ne, %1, %c0_i32_0 : i32
    scf.if %2 {
      %cst = arith.constant 0.000000e+00 : f32
      %31 = vector.broadcast %cst : f32 to vector<8x256xf32>
      %c0_14 = arith.constant 0 : index
      %c0_15 = arith.constant 0 : index
      %c0_16 = arith.constant 0 : index
      %32 = vector.load %arg7[%c0_14, %c0_15, %c0_16] : memref<1x8x256xf32, #tpu.memory_space<vmem>>, vector<1x8x256xf32>
      %33 = vector.shape_cast %32 : vector<1x8x256xf32> to vector<8x256xf32>
      %34 = vector.shape_cast %31 : vector<8x256xf32> to vector<1x8x256xf32>
      tpu.vector_store %arg7[%c0_14, %c0_15, %c0_16], %34 {strides = array<i32>} : memref<1x8x256xf32, #tpu.memory_space<vmem>>, vector<1x8x256xf32>,
    } else {
    }
    %c1_i32 = arith.constant 1 : i32
    %3 = arith.muli %arg0, %c1_i32 : i32
    %4 = arith.addi %3, %arg1 : i32
    %5 = arith.index_cast %4 : i32 to index
    %6 = memref.load %arg2[%5] : memref<1xi32, #tpu.memory_space<smem>>
    %7 = arith.index_cast %4 : i32 to index
    %8 = memref.load %arg3[%7] : memref<1xi32, #tpu.memory_space<smem>>
    %c0 = arith.constant 0 : index
    %c0_1 = arith.constant 0 : index
    %9 = vector.load %arg5[%c0, %c0_1] : memref<32x128xf32, #tpu.memory_space<vmem>>, vector<32x128xf32>
    %c0_2 = arith.constant 0 : index
    %c0_3 = arith.constant 0 : index
    %10 = vector.load %arg6[%c0_2, %c0_3] : memref<32x128xf32, #tpu.memory_space<vmem>>, vector<32x128xf32>
    %11 = arith.subf %9, %10 : vector<32x128xf32>
    %12 = arith.mulf %11, %11 : vector<32x128xf32>
    %13 = arith.mulf %10, %10 : vector<32x128xf32>
    %c0_4 = arith.constant 0 : index
    %c0_5 = arith.constant 0 : index
    %14 = vector.load %arg4[%c0_4, %c0_5] : memref<32x128xi8, #tpu.memory_space<vmem>>, vector<32x128xi8>
    %15 = arith.extsi %14 : vector<32x128xi8> to vector<32x128xi32>
    %c0_i32_6 = arith.constant 0 : i32
    %16 = arith.cmpi sle, %6, %c0_i32_6 : i32
    %c0_i32_7 = arith.constant 0 : i32
    %17 = arith.cmpi sge, %8, %c0_i32_7 : i32
    %18 = arith.andi %16, %17 : i1
    %19 = arith.extui %18 : i1 to i32
    %c0_i32_8 = arith.constant 0 : i32
    %20 = arith.cmpi ne, %19, %c0_i32_8 : i32
    scf.if %20 {
      %c0_i32_14 = arith.constant 0 : i32
      %31 = vector.broadcast %c0_i32_14 : i32 to vector<32x128xi32>
      %32 = arith.cmpi eq, %15, %31 : vector<32x128xi32>
      %cst = arith.constant 0.000000e+00 : f32
      %33 = vector.broadcast %cst : f32 to vector<32x128xf32>
      %34 = arith.select %32, %12, %33 : vector<32x128xi1>, vector<32x128xf32>
      %cst_15 = arith.constant dense<0.000000e+00> : vector<128xf32>
      %35 = vector.multi_reduction <add>, %34, %cst_15 [0] : vector<32x128xf32> to vector<128xf32>
      %36 = vector.shape_cast %35 : vector<128xf32> to vector<1x128xf32>
      %cst_16 = arith.constant 0.000000e+00 : f32
      %37 = vector.broadcast %cst_16 : f32 to vector<32x128xf32>
      %38 = arith.select %32, %13, %37 : vector<32x128xi1>, vector<32x128xf32>
      %cst_17 = arith.constant dense<0.000000e+00> : vector<128xf32>
      %39 = vector.multi_reduction <add>, %38, %cst_17 [0] : vector<32x128xf32> to vector<128xf32>
      %40 = vector.shape_cast %39 : vector<128xf32> to vector<1x128xf32>
      %c0_18 = arith.constant 0 : index
      %c0_19 = arith.constant 0 : index
      %c0_20 = arith.constant 0 : index
      %41 = vector.load %arg7[%c0_18, %c0_19, %c0_20] : memref<1x8x256xf32, #tpu.memory_space<vmem>>, vector<1x1x128xf32>
      %42 = vector.shape_cast %41 : vector<1x1x128xf32> to vector<1x128xf32>
      %43 = arith.addf %42, %36 : vector<1x128xf32>
      %c0_21 = arith.constant 0 : index
      %c0_22 = arith.constant 0 : index
      %c0_23 = arith.constant 0 : index
      %44 = vector.load %arg7[%c0_21, %c0_22, %c0_23] : memref<1x8x256xf32, #tpu.memory_space<vmem>>, vector<1x1x128xf32>
      %45 = vector.shape_cast %44 : vector<1x1x128xf32> to vector<1x128xf32>
      %46 = vector.shape_cast %43 : vector<1x128xf32> to vector<1x1x128xf32>
      tpu.vector_store %arg7[%c0_21, %c0_22, %c0_23], %46 {strides = array<i32>} : memref<1x8x256xf32, #tpu.memory_space<vmem>>, vector<1x1x128xf32>,
      %c0_24 = arith.constant 0 : index
      %c0_25 = arith.constant 0 : index
      %c128 = arith.constant 128 : index
      %47 = vector.load %arg7[%c0_24, %c0_25, %c128] : memref<1x8x256xf32, #tpu.memory_space<vmem>>, vector<1x1x128xf32>
      %48 = vector.shape_cast %47 : vector<1x1x128xf32> to vector<1x128xf32>
      %49 = arith.addf %48, %40 : vector<1x128xf32>
      %c0_26 = arith.constant 0 : index
      %c0_27 = arith.constant 0 : index
      %c128_28 = arith.constant 128 : index
      %50 = vector.load %arg7[%c0_26, %c0_27, %c128_28] : memref<1x8x256xf32, #tpu.memory_space<vmem>>, vector<1x1x128xf32>
      %51 = vector.shape_cast %50 : vector<1x1x128xf32> to vector<1x128xf32>
      %52 = vector.shape_cast %49 : vector<1x128xf32> to vector<1x1x128xf32>
      tpu.vector_store %arg7[%c0_26, %c0_27, %c128_28], %52 {strides = array<i32>} : memref<1x8x256xf32, #tpu.memory_space<vmem>>, vector<1x1x128xf32>,
    } else {
    }
    %c1_i32_9 = arith.constant 1 : i32
    %21 = arith.cmpi sle, %6, %c1_i32_9 : i32
    %c1_i32_10 = arith.constant 1 : i32
    %22 = arith.cmpi sge, %8, %c1_i32_10 : i32
    %23 = arith.andi %21, %22 : i1
    %24 = arith.extui %23 : i1 to i32
    %c0_i32_11 = arith.constant 0 : i32
    %25 = arith.cmpi ne, %24, %c0_i32_11 : i32
    scf.if %25 {
      %c1_i32_14 = arith.constant 1 : i32
      %31 = vector.broadcast %c1_i32_14 : i32 to vector<32x128xi32>
      %32 = arith.cmpi eq, %15, %31 : vector<32x128xi32>
      %cst = arith.constant 0.000000e+00 : f32
      %33 = vector.broadcast %cst : f32 to vector<32x128xf32>
      %34 = arith.select %32, %12, %33 : vector<32x128xi1>, vector<32x128xf32>
      %cst_15 = arith.constant dense<0.000000e+00> : vector<128xf32>
      %35 = vector.multi_reduction <add>, %34, %cst_15 [0] : vector<32x128xf32> to vector<128xf32>
      %36 = vector.shape_cast %35 : vector<128xf32> to vector<1x128xf32>
      %cst_16 = arith.constant 0.000000e+00 : f32
      %37 = vector.broadcast %cst_16 : f32 to vector<32x128xf32>
      %38 = arith.select %32, %13, %37 : vector<32x128xi1>, vector<32x128xf32>
      %cst_17 = arith.constant dense<0.000000e+00> : vector<128xf32>
      %39 = vector.multi_reduction <add>, %38, %cst_17 [0] : vector<32x128xf32> to vector<128xf32>
      %40 = vector.shape_cast %39 : vector<128xf32> to vector<1x128xf32>
      %c0_18 = arith.constant 0 : index
      %c1 = arith.constant 1 : index
      %c0_19 = arith.constant 0 : index
      %41 = vector.load %arg7[%c0_18, %c1, %c0_19] : memref<1x8x256xf32, #tpu.memory_space<vmem>>, vector<1x1x128xf32>
      %42 = vector.shape_cast %41 : vector<1x1x128xf32> to vector<1x128xf32>
      %43 = arith.addf %42, %36 : vector<1x128xf32>
      %c0_20 = arith.constant 0 : index
      %c1_21 = arith.constant 1 : index
      %c0_22 = arith.constant 0 : index
      %44 = vector.load %arg7[%c0_20, %c1_21, %c0_22] : memref<1x8x256xf32, #tpu.memory_space<vmem>>, vector<1x1x128xf32>
      %45 = vector.shape_cast %44 : vector<1x1x128xf32> to vector<1x128xf32>
      %46 = vector.shape_cast %43 : vector<1x128xf32> to vector<1x1x128xf32>
      tpu.vector_store %arg7[%c0_20, %c1_21, %c0_22], %46 {strides = array<i32>} : memref<1x8x256xf32, #tpu.memory_space<vmem>>, vector<1x1x128xf32>,
      %c0_23 = arith.constant 0 : index
      %c1_24 = arith.constant 1 : index
      %c128 = arith.constant 128 : index
      %47 = vector.load %arg7[%c0_23, %c1_24, %c128] : memref<1x8x256xf32, #tpu.memory_space<vmem>>, vector<1x1x128xf32>
      %48 = vector.shape_cast %47 : vector<1x1x128xf32> to vector<1x128xf32>
      %49 = arith.addf %48, %40 : vector<1x128xf32>
      %c0_25 = arith.constant 0 : index
      %c1_26 = arith.constant 1 : index
      %c128_27 = arith.constant 128 : index
      %50 = vector.load %arg7[%c0_25, %c1_26, %c128_27] : memref<1x8x256xf32, #tpu.memory_space<vmem>>, vector<1x1x128xf32>
      %51 = vector.shape_cast %50 : vector<1x1x128xf32> to vector<1x128xf32>
      %52 = vector.shape_cast %49 : vector<1x128xf32> to vector<1x1x128xf32>
      tpu.vector_store %arg7[%c0_25, %c1_26, %c128_27], %52 {strides = array<i32>} : memref<1x8x256xf32, #tpu.memory_space<vmem>>, vector<1x1x128xf32>,
    } else {
    }
    %c2_i32 = arith.constant 2 : i32
    %26 = arith.cmpi sle, %6, %c2_i32 : i32
    %c2_i32_12 = arith.constant 2 : i32
    %27 = arith.cmpi sge, %8, %c2_i32_12 : i32
    %28 = arith.andi %26, %27 : i1
    %29 = arith.extui %28 : i1 to i32
    %c0_i32_13 = arith.constant 0 : i32
    %30 = arith.cmpi ne, %29, %c0_i32_13 : i32
    scf.if %30 {
      %c2_i32_14 = arith.constant 2 : i32
      %31 = vector.broadcast %c2_i32_14 : i32 to vector<32x128xi32>
      %32 = arith.cmpi eq, %15, %31 : vector<32x128xi32>
      %cst = arith.constant 0.000000e+00 : f32
      %33 = vector.broadcast %cst : f32 to vector<32x128xf32>
      %34 = arith.select %32, %12, %33 : vector<32x128xi1>, vector<32x128xf32>
      %cst_15 = arith.constant dense<0.000000e+00> : vector<128xf32>
      %35 = vector.multi_reduction <add>, %34, %cst_15 [0] : vector<32x128xf32> to vector<128xf32>
      %36 = vector.shape_cast %35 : vector<128xf32> to vector<1x128xf32>
      %cst_16 = arith.constant 0.000000e+00 : f32
      %37 = vector.broadcast %cst_16 : f32 to vector<32x128xf32>
      %38 = arith.select %32, %13, %37 : vector<32x128xi1>, vector<32x128xf32>
      %cst_17 = arith.constant dense<0.000000e+00> : vector<128xf32>
      %39 = vector.multi_reduction <add>, %38, %cst_17 [0] : vector<32x128xf32> to vector<128xf32>
      %40 = vector.shape_cast %39 : vector<128xf32> to vector<1x128xf32>
      %c0_18 = arith.constant 0 : index
      %c2 = arith.constant 2 : index
      %c0_19 = arith.constant 0 : index
      %41 = vector.load %arg7[%c0_18, %c2, %c0_19] : memref<1x8x256xf32, #tpu.memory_space<vmem>>, vector<1x1x128xf32>
      %42 = vector.shape_cast %41 : vector<1x1x128xf32> to vector<1x128xf32>
      %43 = arith.addf %42, %36 : vector<1x128xf32>
      %c0_20 = arith.constant 0 : index
      %c2_21 = arith.constant 2 : index
      %c0_22 = arith.constant 0 : index
      %44 = vector.load %arg7[%c0_20, %c2_21, %c0_22] : memref<1x8x256xf32, #tpu.memory_space<vmem>>, vector<1x1x128xf32>
      %45 = vector.shape_cast %44 : vector<1x1x128xf32> to vector<1x128xf32>
      %46 = vector.shape_cast %43 : vector<1x128xf32> to vector<1x1x128xf32>
      tpu.vector_store %arg7[%c0_20, %c2_21, %c0_22], %46 {strides = array<i32>} : memref<1x8x256xf32, #tpu.memory_space<vmem>>, vector<1x1x128xf32>,
      %c0_23 = arith.constant 0 : index
      %c2_24 = arith.constant 2 : index
      %c128 = arith.constant 128 : index
      %47 = vector.load %arg7[%c0_23, %c2_24, %c128] : memref<1x8x256xf32, #tpu.memory_space<vmem>>, vector<1x1x128xf32>
      %48 = vector.shape_cast %47 : vector<1x1x128xf32> to vector<1x128xf32>
      %49 = arith.addf %48, %40 : vector<1x128xf32>
      %c0_25 = arith.constant 0 : index
      %c2_26 = arith.constant 2 : index
      %c128_27 = arith.constant 128 : index
      %50 = vector.load %arg7[%c0_25, %c2_26, %c128_27] : memref<1x8x256xf32, #tpu.memory_space<vmem>>, vector<1x1x128xf32>
      %51 = vector.shape_cast %50 : vector<1x1x128xf32> to vector<1x128xf32>
      %52 = vector.shape_cast %49 : vector<1x128xf32> to vector<1x1x128xf32>
      tpu.vector_store %arg7[%c0_25, %c2_26, %c128_27], %52 {strides = array<i32>} : memref<1x8x256xf32, #tpu.memory_space<vmem>>, vector<1x1x128xf32>,
    } else {
    }
    return
  }
  func.func @transform_0(%arg0: i32, %arg1: i32, %arg2: memref<1xi32, #tpu.memory_space<smem>>, %arg3: memref<1xi32, #tpu.memory_space<smem>>) -> (i32, i32) {
    %c1_i32 = arith.constant 1 : i32
    %0 = arith.muli %arg0, %c1_i32 : i32
    %1 = arith.addi %0, %arg1 : i32
    %c0_i32 = arith.constant 0 : i32
    %2 = arith.minsi %1, %c0_i32 : i32
    %c0_i32_0 = arith.constant 0 : i32
    %c0_i32_1 = arith.constant 0 : i32
    return %2, %c0_i32_0 : i32, i32
  }
  func.func @transform_1(%arg0: i32, %arg1: i32, %arg2: memref<1xi32, #tpu.memory_space<smem>>, %arg3: memref<1xi32, #tpu.memory_space<smem>>) -> (i32, i32) {
    %c1_i32 = arith.constant 1 : i32
    %0 = arith.muli %arg0, %c1_i32 : i32
    %1 = arith.addi %0, %arg1 : i32
    %c0_i32 = arith.constant 0 : i32
    %2 = arith.minsi %1, %c0_i32 : i32
    %c0_i32_0 = arith.constant 0 : i32
    %c0_i32_1 = arith.constant 0 : i32
    return %2, %c0_i32_0 : i32, i32
  }
  func.func @transform_2(%arg0: i32, %arg1: i32, %arg2: memref<1xi32, #tpu.memory_space<smem>>, %arg3: memref<1xi32, #tpu.memory_space<smem>>) -> (i32, i32) {
    %c1_i32 = arith.constant 1 : i32
    %0 = arith.muli %arg0, %c1_i32 : i32
    %1 = arith.addi %0, %arg1 : i32
    %c0_i32 = arith.constant 0 : i32
    %2 = arith.minsi %1, %c0_i32 : i32
    %c0_i32_0 = arith.constant 0 : i32
    %c0_i32_1 = arith.constant 0 : i32
    return %2, %c0_i32_0 : i32, i32
  }
  func.func @transform_3(%arg0: i32, %arg1: i32, %arg2: memref<1xi32, #tpu.memory_space<smem>>, %arg3: memref<1xi32, #tpu.memory_space<smem>>) -> (i32, i32, i32) {
    %c0_i32 = arith.constant 0 : i32
    %c0_i32_0 = arith.constant 0 : i32
    %c0_i32_1 = arith.constant 0 : i32
    return %arg0, %c0_i32, %c0_i32_0 : i32, i32, i32
  }
}

</mosaic_0001>

<llo_original>
// kernel: tpu_custom_call.1
$region0: #{tpu_custom_call.1}
  #allocation0 [shape = 'u32[]', space=smem, size = 0x4, offset = 0x4, fixed_abs, tag = 'smem constant byte address 0x4 - core index']
  #allocation1 [shape = 'u32[144,128]{1,0:T(1,128)}', space=vmem, size = 0x12000, scoped, tag = 'internal scratch']
  #allocation2 [shape = 's32[1]{0}', space=sflag, size = 0x4, scoped, tag = 'scoped memory for tpu_custom_call.1']
  #allocation3 [shape = 's32[1]{0:T(128)S(6)}', space=smem, size = 0x200, scoped, tag = 'prefetched SMEM operand 0']
  #allocation4 [shape = 's32[1]{0:T(128)S(6)}', space=smem, size = 0x200, scoped, tag = 'prefetched SMEM operand 1']
  %s0 = inlined_call_operand.<no memory space> [shape: s32[1], index: 0, kind: input, shape index: {}]
  %s1 = inlined_call_operand.<no memory space> [shape: s32[1], index: 1, kind: input, shape index: {}]
  %s2 = inlined_call_operand.hbm [shape: s8[32,128], index: 2, kind: input, shape index: {}]
  %s3 = inlined_call_operand.hbm [shape: f32[32,128], index: 3, kind: input, shape index: {}]
  %s4 = inlined_call_operand.hbm [shape: f32[32,128], index: 4, kind: input, shape index: {}]
  %s5 = inlined_call_operand.hbm [shape: f32[1,8,256], index: 5, kind: output, shape index: {}]
  %s6 = sld [smem:[#allocation0]]
  $region50: #{tpu_custom_call.1} parent=0
    _
  %s8 = ssub.s32 1, %s6
  %s9 = scalar_select 0, %s8, %s6
  %10 = sst [smem:[#allocation3]] %s0
  %11 = sst [smem:[#allocation4]] %s1
  $region1: #{tpu_custom_call.1} parent=0
    #allocation5 [shape = 'u8[4096]{0}', space=vmem, size = 0x1000, scoped, tag = 'input window, operand 2, single buffered']
    #allocation6 [shape = 's32[1]{0}', space=sflag, size = 0x4, scoped, tag = 'scoped memory for tpu_custom_call.1']
    #allocation7 [shape = 's32[1]{0}', space=sflag, size = 0x4, scoped, tag = 'scoped memory for tpu_custom_call.1']
    #allocation8 [shape = 'u8[16384]{0}', space=vmem, size = 0x4000, scoped, tag = 'input window, operand 3, single buffered']
    #allocation9 [shape = 's32[1]{0}', space=sflag, size = 0x4, scoped, tag = 'scoped memory for tpu_custom_call.1']
    #allocation10 [shape = 'u8[16384]{0}', space=vmem, size = 0x4000, scoped, tag = 'input window, operand 4, single buffered']
    #allocation11 [shape = 'u8[8192]{0}', space=vmem, size = 0x2000, scoped, tag = 'output window, operand 0, single buffered']
    %12 = vsyncpa [#allocation6], 0
    %13 = vsyncpa [#allocation9], 0
    %14 = vsyncpa [#allocation7], 0
    // Predicated region
    $region2: #{tpu_custom_call.1} parent=1 // pred_check
      _
    $region3: #{tpu_custom_call.1} parent=1 // pred_check_branch
      %16 = sbr.rel (0) target = $region5
    $region4: #{tpu_custom_call.1} parent=1 // pred_region
      %s17 = sadd.s32 0, 0
      %p18 = scmp.lt.s32.totalorder %s17, 0
      %s19 = scalar_select %p18, %s17, 0
      %s21 = ssub.s32 128, 128
      %22 = vsyncadd [#allocation6], %s21
      %s23 = smul.addr %s19, 128
      %s24 = scalar_lea.hbm %s2, %s23
      %s26 = sshll.u32 [#allocation5], 4
      %s27 = int_to_ptr.vmem [resolvable:$true] %s26
      %29 = dma.hbm_to_vmem [thread:$0]  %s24, 128, %s27, [#allocation6]
    $region5: #{tpu_custom_call.1} parent=1 // pred_fallthru
      _
    // Predicated region
    $region6: #{tpu_custom_call.1} parent=1 // pred_check
      _
    $region7: #{tpu_custom_call.1} parent=1 // pred_check_branch
      %31 = sbr.rel (0) target = $region9
    $region8: #{tpu_custom_call.1} parent=1 // pred_region
      %s32 = sadd.s32 0, 0
      %p33 = scmp.lt.s32.totalorder %s32, 0
      %s34 = scalar_select %p33, %s32, 0
      %s35 = smul.u32 4, %s34
      %s37 = ssub.s32 512, 512
      %38 = vsyncadd [#allocation9], %s37
      %s39 = smul.addr %s35, 128
      %s40 = scalar_lea.hbm %s3, %s39
      %s41 = sshll.u32 [#allocation8], 4
      %s42 = int_to_ptr.vmem [resolvable:$true] %s41
      %47 = dma.hbm_to_vmem [thread:$0]  %s40, 512, %s42, [#allocation9], 128, 128, 8
    $region9: #{tpu_custom_call.1} parent=1 // pred_fallthru
      _
    // Predicated region
    $region10: #{tpu_custom_call.1} parent=1 // pred_check
      _
    $region11: #{tpu_custom_call.1} parent=1 // pred_check_branch
      %49 = sbr.rel (0) target = $region13
    $region12: #{tpu_custom_call.1} parent=1 // pred_region
      %s50 = sadd.s32 0, 0
      %p51 = scmp.lt.s32.totalorder %s50, 0
      %s52 = scalar_select %p51, %s50, 0
      %s53 = smul.u32 4, %s52
      %s55 = ssub.s32 512, 512
      %56 = vsyncadd [#allocation9], %s55
      %s57 = smul.addr %s53, 128
      %s58 = scalar_lea.hbm %s4, %s57
      %s59 = sshll.u32 [#allocation10], 4
      %s60 = int_to_ptr.vmem [resolvable:$true] %s59
      %65 = dma.hbm_to_vmem [thread:$0]  %s58, 512, %s60, [#allocation9], 128, 128, 8
    $region13: #{tpu_custom_call.1} parent=1 // pred_fallthru
      _
    // Predicated region
    $region14: #{tpu_custom_call.1} parent=1 // pred_check
      _
    $region15: #{tpu_custom_call.1} parent=1 // pred_check_branch
      %67 = sbr.rel (0) target = $region17
    $region16: #{tpu_custom_call.1} parent=1 // pred_region
      %68 = dma.done [#allocation6], 128
    $region17: #{tpu_custom_call.1} parent=1 // pred_fallthru
      _
    // Predicated region
    $region18: #{tpu_custom_call.1} parent=1 // pred_check
      _
    $region19: #{tpu_custom_call.1} parent=1 // pred_check_branch
      %70 = sbr.rel (0) target = $region21
    $region20: #{tpu_custom_call.1} parent=1 // pred_region
      %71 = dma.done [#allocation9], 512
    $region21: #{tpu_custom_call.1} parent=1 // pred_fallthru
      _
    // Predicated region
    $region22: #{tpu_custom_call.1} parent=1 // pred_check
      _
    $region23: #{tpu_custom_call.1} parent=1 // pred_check_branch
      %73 = sbr.rel (0) target = $region25
    $region24: #{tpu_custom_call.1} parent=1 // pred_region
      %74 = dma.done [#allocation9], 512
    $region25: #{tpu_custom_call.1} parent=1 // pred_fallthru
      _
    %s75 = sadd.s32 0, 0
    %p76 = scmp.lt.s32.totalorder %s75, 0
    %s77 = scalar_select %p76, %s75, 0
    %s78 = sadd.s32 0, 0
    %p79 = scmp.lt.s32.totalorder %s78, 0
    %s80 = scalar_select %p79, %s78, 0
    %s81 = smul.u32 4, %s80
    %s82 = sadd.s32 0, 0
    %p83 = scmp.lt.s32.totalorder %s82, 0
    %s84 = scalar_select %p83, %s82, 0
    %s85 = smul.u32 4, %s84
    %p86 = scmp.eq.s32.totalorder 0, 0
    // Predicated region
    $region26: #{tpu_custom_call.1} parent=1 // pred_check
      %p87 = pneg %p86
    $region27: #{tpu_custom_call.1} parent=1 // pred_check_branch
      %89 = sbr.rel (%p87) target = $region29
    $region28: #{tpu_custom_call.1} parent=1 // pred_region
      %90 = vst [vmem:[#allocation11] sm:$0xff] 0.0
      %91 = vst [vmem:[#allocation11 + $0x8] sm:$0xff] 0.0
    $region29: #{tpu_custom_call.1} parent=1 // pred_fallthru
      _
    %s92 = sadd.s32 0, 0
    %s93 = sld [smem:[#allocation3 + %s92]]
    %s94 = sld [smem:[#allocation4 + %s92]]
    %v95 = vld [vmem:[#allocation8] sm:$0xff]
    %v96 = vld [vmem:[#allocation8 + $0x8] sm:$0xff]
    %v97 = vld [vmem:[#allocation8 + $0x10] sm:$0xff]
    %v98 = vld [vmem:[#allocation8 + $0x18] sm:$0xff]
    %v99 = vld [vmem:[#allocation10] sm:$0xff]
    %v100 = vld [vmem:[#allocation10 + $0x8] sm:$0xff]
    %v101 = vld [vmem:[#allocation10 + $0x10] sm:$0xff]
    %v102 = vld [vmem:[#allocation10 + $0x18] sm:$0xff]
    %v103 = vsub.f32 %v95, %v99
    %v104 = vsub.f32 %v96, %v100
    %v105 = vsub.f32 %v97, %v101
    %v106 = vsub.f32 %v98, %v102
    %v107 = vmul.f32 %v103, %v103
    %v108 = vmul.f32 %v104, %v104
    %v109 = vmul.f32 %v105, %v105
    %v110 = vmul.f32 %v106, %v106
    %v111 = vmul.f32 %v99, %v99
    %v112 = vmul.f32 %v100, %v100
    %v113 = vmul.f32 %v101, %v101
    %v114 = vmul.f32 %v102, %v102
    %v115 = vld [vmem:[#allocation5] sm:$0xff]
    %v116 = vunpack.c.0.s8 %v115
    %v117 = vunpack.c.1.s8 %v115
    %v118 = vunpack.c.2.s8 %v115
    %v119 = vunpack.c.3.s8 %v115
    %p120 = scmp.le.s32.totalorder %s93, 0
    %p121 = scmp.ge.s32.totalorder %s94, 0
    %p122 = pnand %p120, %p121
    %p123 = pneg %p122
    // Predicated region
    $region30: #{tpu_custom_call.1} parent=1 // pred_check
      _
    $region31: #{tpu_custom_call.1} parent=1 // pred_check_branch
      %125 = sbr.rel (%p122) target = $region33
    $region32: #{tpu_custom_call.1} parent=1 // pred_region
      %vm126 = vcmp.eq.s32.totalorder %v116, 0
      %vm127 = vcmp.eq.s32.totalorder %v117, 0
      %vm128 = vcmp.eq.s32.totalorder %v118, 0
      %vm129 = vcmp.eq.s32.totalorder %v119, 0
      %v130 = vsel %vm126, %v107, 0.0
      %v131 = vsel %vm127, %v108, 0.0
      %v132 = vsel %vm128, %v109, 0.0
      %v133 = vsel %vm129, %v110, 0.0
      %v134 = vadd.f32 %v130, %v131
      %v135 = vadd.f32 %v134, %v132
      %v136 = vadd.f32 %v135, %v133
      %v137 = vrot.slane %v136, 4
      %v138 = vadd.f32 %v136, %v137
      %v139 = vrot.slane %v138, 2
      %v140 = vadd.f32 %v138, %v139
      %v141 = vrot.slane %v140, 1
      %v142 = vadd.f32 %v140, %v141
      %v143 = vsel %vm126, %v111, 0.0
      %v144 = vsel %vm127, %v112, 0.0
      %v145 = vsel %vm128, %v113, 0.0
      %v146 = vsel %vm129, %v114, 0.0
      %v147 = vadd.f32 %v143, %v144
      %v148 = vadd.f32 %v147, %v145
      %v149 = vadd.f32 %v148, %v146
      %v150 = vrot.slane %v149, 4
      %v151 = vadd.f32 %v149, %v150
      %v152 = vrot.slane %v151, 2
      %v153 = vadd.f32 %v151, %v152
      %v154 = vrot.slane %v153, 1
      %v155 = vadd.f32 %v153, %v154
      %v156 = vld [vmem:[#allocation11] ss:$0 sm:$0xff]
      %v157 = vadd.f32 %v156, %v142
      %158 = vst [vmem:[#allocation11] sm:$0x1] %v157
      %v159 = vld [vmem:[#allocation11 + $0x8] ss:$0 sm:$0xff]
      %v160 = vadd.f32 %v159, %v155
      %161 = vst [vmem:[#allocation11 + $0x8] sm:$0x1] %v160
    $region33: #{tpu_custom_call.1} parent=1 // pred_fallthru
      _
    %p162 = scmp.le.s32.totalorder %s93, 1
    %p163 = scmp.ge.s32.totalorder %s94, 1
    %p164 = pnand %p162, %p163
    %p165 = pneg %p164
    // Predicated region
    $region34: #{tpu_custom_call.1} parent=1 // pred_check
      _
    $region35: #{tpu_custom_call.1} parent=1 // pred_check_branch
      %167 = sbr.rel (%p164) target = $region37
    $region36: #{tpu_custom_call.1} parent=1 // pred_region
      %vm168 = vcmp.eq.s32.totalorder %v116, 1
      %vm169 = vcmp.eq.s32.totalorder %v117, 1
      %vm170 = vcmp.eq.s32.totalorder %v118, 1
      %vm171 = vcmp.eq.s32.totalorder %v119, 1
      %v172 = vsel %vm168, %v107, 0.0
      %v173 = vsel %vm169, %v108, 0.0
      %v174 = vsel %vm170, %v109, 0.0
      %v175 = vsel %vm171, %v110, 0.0
      %v176 = vadd.f32 %v172, %v173
      %v177 = vadd.f32 %v176, %v174
      %v178 = vadd.f32 %v177, %v175
      %v179 = vrot.slane %v178, 4
      %v180 = vadd.f32 %v178, %v179
      %v181 = vrot.slane %v180, 2
      %v182 = vadd.f32 %v180, %v181
      %v183 = vrot.slane %v182, 1
      %v184 = vadd.f32 %v182, %v183
      %v185 = vsel %vm168, %v111, 0.0
      %v186 = vsel %vm169, %v112, 0.0
      %v187 = vsel %vm170, %v113, 0.0
      %v188 = vsel %vm171, %v114, 0.0
      %v189 = vadd.f32 %v185, %v186
      %v190 = vadd.f32 %v189, %v187
      %v191 = vadd.f32 %v190, %v188
      %v192 = vrot.slane %v191, 4
      %v193 = vadd.f32 %v191, %v192
      %v194 = vrot.slane %v193, 2
      %v195 = vadd.f32 %v193, %v194
      %v196 = vrot.slane %v195, 1
      %v197 = vadd.f32 %v195, %v196
      %v198 = vld [vmem:[#allocation11 + $0x1] ss:$0 sm:$0xff]
      %v199 = vadd.f32 %v198, %v184
      %200 = vst [vmem:[#allocation11 + $0x1] sm:$0x1] %v199
      %v201 = vld [vmem:[#allocation11 + $0x9] ss:$0 sm:$0xff]
      %v202 = vadd.f32 %v201, %v197
      %203 = vst [vmem:[#allocation11 + $0x9] sm:$0x1] %v202
    $region37: #{tpu_custom_call.1} parent=1 // pred_fallthru
      _
    %p204 = scmp.le.s32.totalorder %s93, 2
    %p205 = scmp.ge.s32.totalorder %s94, 2
    %p206 = pnand %p204, %p205
    %p207 = pneg %p206
    // Predicated region
    $region38: #{tpu_custom_call.1} parent=1 // pred_check
      _
    $region39: #{tpu_custom_call.1} parent=1 // pred_check_branch
      %209 = sbr.rel (%p206) target = $region41
    $region40: #{tpu_custom_call.1} parent=1 // pred_region
      %vm210 = vcmp.eq.s32.totalorder %v116, 2
      %vm211 = vcmp.eq.s32.totalorder %v117, 2
      %vm212 = vcmp.eq.s32.totalorder %v118, 2
      %vm213 = vcmp.eq.s32.totalorder %v119, 2
      %v214 = vsel %vm210, %v107, 0.0
      %v215 = vsel %vm211, %v108, 0.0
      %v216 = vsel %vm212, %v109, 0.0
      %v217 = vsel %vm213, %v110, 0.0
      %v218 = vadd.f32 %v214, %v215
      %v219 = vadd.f32 %v218, %v216
      %v220 = vadd.f32 %v219, %v217
      %v221 = vrot.slane %v220, 4
      %v222 = vadd.f32 %v220, %v221
      %v223 = vrot.slane %v222, 2
      %v224 = vadd.f32 %v222, %v223
      %v225 = vrot.slane %v224, 1
      %v226 = vadd.f32 %v224, %v225
      %v227 = vsel %vm210, %v111, 0.0
      %v228 = vsel %vm211, %v112, 0.0
      %v229 = vsel %vm212, %v113, 0.0
      %v230 = vsel %vm213, %v114, 0.0
      %v231 = vadd.f32 %v227, %v228
      %v232 = vadd.f32 %v231, %v229
      %v233 = vadd.f32 %v232, %v230
      %v234 = vrot.slane %v233, 4
      %v235 = vadd.f32 %v233, %v234
      %v236 = vrot.slane %v235, 2
      %v237 = vadd.f32 %v235, %v236
      %v238 = vrot.slane %v237, 1
      %v239 = vadd.f32 %v237, %v238
      %v240 = vld [vmem:[#allocation11 + $0x2] ss:$0 sm:$0xff]
      %v241 = vadd.f32 %v240, %v226
      %242 = vst [vmem:[#allocation11 + $0x2] sm:$0x1] %v241
      %v243 = vld [vmem:[#allocation11 + $0xa] ss:$0 sm:$0xff]
      %v244 = vadd.f32 %v243, %v239
      %245 = vst [vmem:[#allocation11 + $0xa] sm:$0x1] %v244
    $region41: #{tpu_custom_call.1} parent=1 // pred_fallthru
      _
    // Predicated region
    $region42: #{tpu_custom_call.1} parent=1 // pred_check
      _
    $region43: #{tpu_custom_call.1} parent=1 // pred_check_branch
      %247 = sbr.rel (0) target = $region45
    $region44: #{tpu_custom_call.1} parent=1 // pred_region
      %s249 = ssub.s32 256, 256
      %250 = vsyncadd [#allocation7], %s249
      %s252 = sshll.u32 [#allocation11], 4
      %s253 = int_to_ptr.vmem [resolvable:$true] %s252
      %255 = dma.vmem_to_hbm [thread:$0]  %s253, 256, %s5, [#allocation7]
    $region45: #{tpu_custom_call.1} parent=1 // pred_fallthru
      _
    // Predicated region
    $region46: #{tpu_custom_call.1} parent=1 // pred_check
      _
    $region47: #{tpu_custom_call.1} parent=1 // pred_check_branch
      %257 = sbr.rel (0) target = $region49
    $region48: #{tpu_custom_call.1} parent=1 // pred_region
      %258 = dma.done [#allocation7], 256
    $region49: #{tpu_custom_call.1} parent=1 // pred_fallthru
      _
    %259 = vsyncpa [#allocation6], 1
    %260 = vsyncpa [#allocation9], 1
    %261 = vsyncpa [#allocation7], 1

</llo_original>
